<compile_context>
chip_gen: v5e
topology: v5e:2x2
jax: 0.10.0
libtpu: 0.0.40
codegen_flags: <defaults>
</compile_context>

<pallas_src>
import functools
import math

import jax
import jax.numpy as jnp
from jax.experimental import pallas as pl
from jax.experimental.pallas import tpu as pltpu


def _label_adapter_kernel(x_ref, w_ref, p_ref, wrow_ref, y_ref, hw_ref, hb_ref,
                          out_ref, *, block_b, seq_pad, inverse, approx_recip):
    # (1) feature projection on the MXU (bf16 in, f32 accumulate)       [rows, hid]
    v = jnp.dot(x_ref[...], w_ref[...], preferred_element_type=jnp.float32)

    # (2) cosine-similarity numerator against pre-normalized P^T        [rows, H]
    num = jnp.dot(v.astype(p_ref.dtype), p_ref[...],
                  preferred_element_type=jnp.float32)

    # (3) one fused per-row scale: 1/max(||v||,1e-8) * temporal_weight/T
    #     (EUP rsqrt; wrow already carries the geometric decay AND 1/temperature)
    inv_v = jax.lax.rsqrt(jnp.maximum(jnp.sum(v * v, axis=-1, keepdims=True),
                                      jnp.float32(1e-16)))               # [rows, 1]
    gate_w = num * (inv_v * wrow_ref[...])                               # [rows, H]

    # (4) weighted sum over sequence: tile-aligned reshape + sublane reduce.
    if seq_pad == 1:
        gate = gate_w                                                    # [TB, H]
    else:
        gate = jnp.sum(gate_w.reshape(block_b, seq_pad, gate_w.shape[-1]),
                       axis=1)                                           # [TB, H]

    # (5) softmax over heads (temperature already folded into the weights)
    g = gate - jnp.max(gate, axis=-1, keepdims=True)
    e = jnp.exp(g)
    denom = jnp.sum(e, axis=-1, keepdims=True)
    if approx_recip:
        sm = e * pl.reciprocal(denom, approx=True)
    else:
        sm = e / denom

    # (6) LabelAdaptHeads (params pre-adjusted in the wrapper -> pure FMA)
    y = y_ref[...]                                                       # [TB, 1]
    if inverse:
        trans = (y - hb_ref[...]) * hw_ref[...]      # hw_ref holds 1/(gamma+1e-9)
    else:
        trans = hw_ref[...] * y + hb_ref[...]        # hw_ref holds gamma+1e-9

    # Output is TB scalars per step; lane-dense repacking not worth the relayout.
    out_ref[...] = jnp.sum(sm * trans, axis=-1, keepdims=True)           # [TB, 1]


def label_adapter_forward(x, y, params, *, temperature=4.0, decay_rate=0.5,
                          inverse=False, block_b=256,
                          matmul_dtype=jnp.bfloat16, approx_recip=True):
    """params = dict(linear_w=[x_dim,hid], P=[H,hid], head_w=[1,H], head_b=[1,H])."""
    x = x.astype(jnp.float32)
    if x.ndim == 2:
        x = x[:, None, :]
    elif x.ndim != 3:
        raise ValueError("x must be [B, F] or [B, S, F]")
    B, S, F = x.shape

    # Geometric-decay temporal weights with 1/temperature folded in (S==1 -> [1/T]).
    exponents = jnp.arange(S, dtype=jnp.float32)
    w = jnp.power(jnp.float32(decay_rate), S - 1 - exponents)
    tw = (w / jnp.sum(w)) * jnp.float32(1.0 / float(temperature))

    # ---- padding / tile sizing so every block is (8,128)-legal and the in-kernel
    #      reshape is sublane aligned -------------------------------------------
    s_pad = S if S == 1 else -(-S // 8) * 8
    tb = min(int(block_b), B)
    if tb < B:
        tb = max(8, (tb // 8) * 8)           # row blocks stay sublane aligned when tiling
    b_pad = -(-B // tb) * tb
    nb = b_pad // tb
    rows = tb * s_pad                        # x rows per grid step (whole batches)

    x_p = jnp.pad(x, ((0, b_pad - B), (0, s_pad - S), (0, 0)))
    x_flat = x_p.reshape(b_pad * s_pad, F).astype(matmul_dtype)

    tw_pad = jnp.pad(tw, (0, s_pad - S))                     # zero weight on padded steps
    wrow = jnp.tile(tw_pad, tb).reshape(rows, 1)             # per-row scale, same every tile

    y_p = jnp.pad(y.astype(jnp.float32).reshape(-1, 1), ((0, b_pad - B), (0, 0)))

    w_lin = params["linear_w"].astype(matmul_dtype)          # [F, hid]
    P = params["P"].astype(jnp.float32)                      # [H, hid]
    p_norm = jnp.maximum(jnp.linalg.norm(P, axis=-1, keepdims=True), 1e-8)
    p_hat_t = (P / p_norm).T.astype(matmul_dtype)            # [hid, H], pre-normalized
    hw_raw = params["head_w"].astype(jnp.float32)            # [1, H]
    hb = params["head_b"].astype(jnp.float32)                # [1, H]
    hw = (1.0 / (hw_raw + 1e-9)) if inverse else (hw_raw + 1e-9)
    hid, H = p_hat_t.shape

    kernel = functools.partial(
        _label_adapter_kernel,
        block_b=tb, seq_pad=s_pad,
        inverse=bool(inverse), approx_recip=bool(approx_recip))

    # Explicit VMEM budget with headroom (capped for v7x's 64 MiB physical VMEM).
    mm_bytes = jnp.dtype(matmul_dtype).itemsize
    est = (2 * (rows * F * mm_bytes + tb * 4 + tb * 4)            # double-buffered x, y, out
           + (F * hid + hid * H) * mm_bytes + rows * 4 + 2 * H * 4  # resident params
           + rows * (hid + 4 * H) * 4 + tb * H * 16               # f32 intermediates
           + (4 << 20))
    vmem_limit = int(min(max(est, 16 << 20), 64 << 20))

    out = pl.pallas_call(
        kernel,
        out_shape=jax.ShapeDtypeStruct((b_pad, 1), jnp.float32),
        grid=(nb,),
        in_specs=[
            pl.BlockSpec((rows, F), lambda i: (i, 0)),   # x rows: streamed, double-buffered
            pl.BlockSpec((F, hid), lambda i: (0, 0)),    # linear weight (resident)
            pl.BlockSpec((hid, H), lambda i: (0, 0)),    # normalized P^T (resident)
            pl.BlockSpec((rows, 1), lambda i: (0, 0)),   # per-row temporal weights / T (resident)
            pl.BlockSpec((tb, 1), lambda i: (i, 0)),     # y
            pl.BlockSpec((1, H), lambda i: (0, 0)),      # head gamma (pre-adjusted, resident)
            pl.BlockSpec((1, H), lambda i: (0, 0)),      # head beta (resident)
        ],
        out_specs=pl.BlockSpec((tb, 1), lambda i: (i, 0)),
        compiler_params=pltpu.CompilerParams(
            dimension_semantics=("parallel",),
            vmem_limit_bytes=vmem_limit),
    )(x_flat, w_lin, p_hat_t, wrow, y_p, hw, hb)

    return out[:B, 0]                                     # [B]


def _reference_forward(x, y, params, *, temperature=4.0, decay_rate=0.5, inverse=False):
    """Pure-JAX reference mirroring the PyTorch module."""
    w_lin, P = params["linear_w"], params["P"]
    hw, hb = params["head_w"], params["head_b"]
    v = x @ w_lin
    vn = jnp.maximum(jnp.linalg.norm(v, axis=-1, keepdims=True), 1e-8)
    pn = jnp.maximum(jnp.linalg.norm(P, axis=-1), 1e-8)
    gate = (v @ P.T) / (vn * pn)
    if x.ndim == 3:
        S = x.shape[1]
        e = jnp.arange(S, dtype=jnp.float32)
        w = decay_rate ** (S - 1 - e)
        w = w / w.sum()
        gate = (gate * w[None, :, None]).sum(axis=1)
    gate = jax.nn.softmax(gate / temperature, axis=-1)
    yb = y.reshape(-1, 1)
    if inverse:
        trans = (yb - hb) / (hw + 1e-9)
    else:
        trans = (hw + 1e-9) * yb + hb
    return (gate * trans).sum(-1)


if __name__ == "__main__":
    # Small shapes: batch=2, seq=8, x_dim=16, hid_dim=32, num_head=4
    B, S, X_DIM, HID, H = 2, 8, 16, 32, 4
    key = jax.random.PRNGKey(0)
    k1, k2, k3, k4, k5 = jax.random.split(key, 5)

    lin_bound = 1.0 / math.sqrt(X_DIM)
    params = {
        # nn.Linear(x_dim, hid, bias=False) weight is [hid, x_dim]; stored transposed.
        "linear_w": jax.random.uniform(k1, (X_DIM, HID), jnp.float32, -lin_bound, lin_bound),
        # CosineSimilarityAttention.P: kaiming_uniform(a=sqrt(5)) -> bound 1/sqrt(hid)
        "P": jax.random.uniform(k2, (H, HID), jnp.float32,
                                -1.0 / math.sqrt(HID), 1.0 / math.sqrt(HID)),
        # LabelAdaptHeads: weight ~ U(0.75, 1.25), bias = 1/8
        "head_w": jax.random.uniform(k3, (1, H), jnp.float32, 0.75, 1.25),
        "head_b": jnp.full((1, H), 1.0 / 8.0, jnp.float32),
    }

    x = jax.random.normal(k4, (B, S, X_DIM), jnp.float32)
    y = jax.random.normal(k5, (B,), jnp.float32)
    ref = _reference_forward(x, y, params)

    # (1) exact path (f32 matmuls, exact reciprocal) -> tight tolerance
    out_f32 = jax.block_until_ready(label_adapter_forward(
        x, y, params, matmul_dtype=jnp.float32, approx_recip=False))
    assert out_f32.shape == (B,)
    assert jnp.allclose(out_f32, ref, atol=1e-4, rtol=1e-4), (out_f32, ref)

    # (2) production path: bf16 MXU inputs + EUP approx reciprocal -> loose tolerance
    out_bf16 = jax.block_until_ready(label_adapter_forward(x, y, params))
    assert jnp.allclose(out_bf16, ref, atol=5e-2, rtol=5e-2), (out_bf16, ref)

    # (3) inverse label transform path
    out_inv = jax.block_until_ready(label_adapter_forward(
        x, y, params, inverse=True, matmul_dtype=jnp.float32, approx_recip=False))
    ref_inv = _reference_forward(x, y, params, inverse=True)
    assert jnp.allclose(out_inv, ref_inv, atol=1e-4, rtol=1e-4), (out_inv, ref_inv)

    # (4) 2-D input path (S == 1 kernel specialization)
    x2 = jax.random.normal(k4, (B, X_DIM), jnp.float32)
    out2 = jax.block_until_ready(label_adapter_forward(
        x2, y, params, matmul_dtype=jnp.float32, approx_recip=False))
    ref2 = _reference_forward(x2, y, params)
    assert jnp.allclose(out2, ref2, atol=1e-4, rtol=1e-4), (out2, ref2)

    # (5) multi-tile grid with batch and sequence padding (B=20 -> 24, S=5 -> 8)
    Bt, St = 20, 5
    kx, ky = jax.random.split(k5)
    xt = jax.random.normal(kx, (Bt, St, X_DIM), jnp.float32)
    yt = jax.random.normal(ky, (Bt,), jnp.float32)
    out_t = jax.block_until_ready(label_adapter_forward(
        xt, yt, params, block_b=8, matmul_dtype=jnp.float32, approx_recip=False))
    ref_t = _reference_forward(xt, yt, params)
    assert out_t.shape == (Bt,)
    assert jnp.allclose(out_t, ref_t, atol=1e-4, rtol=1e-4), (out_t, ref_t)

    print("KERNEL_OK")
</pallas_src>

<mosaic_0001>
module attributes {stable_mosaic.version = 11 : i64} {
  func.func @_label_adapter_kernel(%arg0: i32, %arg1: memref<16x16xf32, #tpu.memory_space<vmem>>, %arg2: memref<16x32xf32, #tpu.memory_space<vmem>>, %arg3: memref<32x4xf32, #tpu.memory_space<vmem>>, %arg4: memref<16x1xf32, #tpu.memory_space<vmem>>, %arg5: memref<2x1xf32, #tpu.memory_space<vmem>>, %arg6: memref<1x4xf32, #tpu.memory_space<vmem>>, %arg7: memref<1x4xf32, #tpu.memory_space<vmem>>, %arg8: memref<2x1xf32, #tpu.memory_space<vmem>>) attributes {dimension_semantics = [#tpu.dimension_semantics<parallel>], iteration_bounds = array<i64: 1>, scalar_prefetch = 0 : i64, scratch_operands = 0 : i64, tpu.core_type = #tpu.core_type<tc>, window_params = [{transform_indices = @transform_0, window_bounds = array<i64: 16, 16>}, {pipeline_mode = #tpu.pipeline_mode<synchronous>, transform_indices = @transform_1, window_bounds = array<i64: 16, 32>}, {pipeline_mode = #tpu.pipeline_mode<synchronous>, transform_indices = @transform_2, window_bounds = array<i64: 32, 4>}, {pipeline_mode = #tpu.pipeline_mode<synchronous>, transform_indices = @transform_3, window_bounds = array<i64: 16, 1>}, {transform_indices = @transform_4, window_bounds = array<i64: 2, 1>}, {pipeline_mode = #tpu.pipeline_mode<synchronous>, transform_indices = @transform_5, window_bounds = array<i64: 1, 4>}, {pipeline_mode = #tpu.pipeline_mode<synchronous>, transform_indices = @transform_6, window_bounds = array<i64: 1, 4>}, {transform_indices = @transform_7, window_bounds = array<i64: 2, 1>}]} {
    %c0 = arith.constant 0 : index
    %c0_0 = arith.constant 0 : index
    %0 = vector.load %arg1[%c0, %c0_0] : memref<16x16xf32, #tpu.memory_space<vmem>>, vector<16x16xf32>
    %c0_1 = arith.constant 0 : index
    %c0_2 = arith.constant 0 : index
    %1 = vector.load %arg2[%c0_1, %c0_2] : memref<16x32xf32, #tpu.memory_space<vmem>>, vector<16x32xf32>
    %cst = arith.constant dense<0.000000e+00> : vector<16x32xf32>
    %2 = tpu.matmul %0, %1, %cst {dimension_numbers = #tpu.dot_dimension_numbers<[1], [0], [0], [1], [0, 0, 1, 1], [], []>} : vector<16x16xf32>, vector<16x32xf32>, vector<16x32xf32> -> vector<16x32xf32>
    %c0_3 = arith.constant 0 : index
    %c0_4 = arith.constant 0 : index
    %3 = vector.load %arg3[%c0_3, %c0_4] : memref<32x4xf32, #tpu.memory_space<vmem>>, vector<32x4xf32>
    %cst_5 = arith.constant dense<0.000000e+00> : vector<16x4xf32>
    %4 = tpu.matmul %2, %3, %cst_5 {dimension_numbers = #tpu.dot_dimension_numbers<[1], [0], [0], [1], [0, 0, 1, 1], [], []>} : vector<16x32xf32>, vector<32x4xf32>, vector<16x4xf32> -> vector<16x4xf32>
    %5 = arith.mulf %2, %2 : vector<16x32xf32>
    %cst_6 = arith.constant dense<0.000000e+00> : vector<16xf32>
    %6 = vector.multi_reduction <add>, %5, %cst_6 [1] : vector<16x32xf32> to vector<16xf32>
    %7 = vector.shape_cast %6 : vector<16xf32> to vector<16x1xf32>
    %cst_7 = arith.constant 1.000000e-16 : f32
    %8 = vector.broadcast %cst_7 : f32 to vector<16x1xf32>
    %9 = arith.maximumf %7, %8 : vector<16x1xf32>
    %10 = math.rsqrt %9 : vector<16x1xf32>
    %c0_8 = arith.constant 0 : index
    %c0_9 = arith.constant 0 : index
    %11 = vector.load %arg4[%c0_8, %c0_9] : memref<16x1xf32, #tpu.memory_space<vmem>>, vector<16x1xf32>
    %12 = arith.mulf %10, %11 : vector<16x1xf32>
    %13 = vector.broadcast %12 : vector<16x1xf32> to vector<16x4xf32>
    %14 = arith.mulf %4, %13 : vector<16x4xf32>
    %15 = vector.shape_cast %14 : vector<16x4xf32> to vector<2x8x4xf32>
    %cst_10 = arith.constant dense<0.000000e+00> : vector<2x4xf32>
    %16 = vector.multi_reduction <add>, %15, %cst_10 [1] : vector<2x8x4xf32> to vector<2x4xf32>
    %cst_11 = arith.constant dense<0xFF800000> : vector<2xf32>
    %17 = vector.multi_reduction <maximumf>, %16, %cst_11 [1] : vector<2x4xf32> to vector<2xf32>
    %18 = vector.shape_cast %17 : vector<2xf32> to vector<2x1xf32>
    %19 = vector.broadcast %18 : vector<2x1xf32> to vector<2x4xf32>
    %20 = arith.subf %16, %19 : vector<2x4xf32>
    %21 = math.exp %20 : vector<2x4xf32>
    %cst_12 = arith.constant dense<0.000000e+00> : vector<2xf32>
    %22 = vector.multi_reduction <add>, %21, %cst_12 [1] : vector<2x4xf32> to vector<2xf32>
    %23 = vector.shape_cast %22 : vector<2xf32> to vector<2x1xf32>
    %24 = vector.broadcast %23 : vector<2x1xf32> to vector<2x4xf32>
    %25 = arith.divf %21, %24 : vector<2x4xf32>
    %c0_13 = arith.constant 0 : index
    %c0_14 = arith.constant 0 : index
    %26 = vector.load %arg5[%c0_13, %c0_14] : memref<2x1xf32, #tpu.memory_space<vmem>>, vector<2x1xf32>
    %c0_15 = arith.constant 0 : index
    %c0_16 = arith.constant 0 : index
    %27 = vector.load %arg6[%c0_15, %c0_16] : memref<1x4xf32, #tpu.memory_space<vmem>>, vector<1x4xf32>
    %28 = vector.broadcast %27 : vector<1x4xf32> to vector<2x4xf32>
    %29 = vector.broadcast %26 : vector<2x1xf32> to vector<2x4xf32>
    %30 = arith.mulf %28, %29 : vector<2x4xf32>
    %c0_17 = arith.constant 0 : index
    %c0_18 = arith.constant 0 : index
    %31 = vector.load %arg7[%c0_17, %c0_18] : memref<1x4xf32, #tpu.memory_space<vmem>>, vector<1x4xf32>
    %32 = vector.broadcast %31 : vector<1x4xf32> to vector<2x4xf32>
    %33 = arith.addf %30, %32 : vector<2x4xf32>
    %34 = arith.mulf %25, %33 : vector<2x4xf32>
    %cst_19 = arith.constant dense<0.000000e+00> : vector<2xf32>
    %35 = vector.multi_reduction <add>, %34, %cst_19 [1] : vector<2x4xf32> to vector<2xf32>
    %36 = vector.shape_cast %35 : vector<2xf32> to vector<2x1xf32>
    %c0_20 = arith.constant 0 : index
    %c0_21 = arith.constant 0 : index
    %37 = vector.load %arg8[%c0_20, %c0_21] : memref<2x1xf32, #tpu.memory_space<vmem>>, vector<2x1xf32>
    tpu.vector_store %arg8[%c0_20, %c0_21], %36 {strides = array<i32>} : memref<2x1xf32, #tpu.memory_space<vmem>>, vector<2x1xf32>,
    return
  }
  func.func @transform_0(%arg0: i32) -> (i32, i32) {
    %c0_i32 = arith.constant 0 : i32
    %c0_i32_0 = arith.constant 0 : i32
    return %arg0, %c0_i32 : i32, i32
  }
  func.func @transform_1(%arg0: i32) -> (i32, i32) {
    %c0_i32 = arith.constant 0 : i32
    %c0_i32_0 = arith.constant 0 : i32
    %c0_i32_1 = arith.constant 0 : i32
    return %c0_i32, %c0_i32_0 : i32, i32
  }
  func.func @transform_2(%arg0: i32) -> (i32, i32) {
    %c0_i32 = arith.constant 0 : i32
    %c0_i32_0 = arith.constant 0 : i32
    %c0_i32_1 = arith.constant 0 : i32
    return %c0_i32, %c0_i32_0 : i32, i32
  }
  func.func @transform_3(%arg0: i32) -> (i32, i32) {
    %c0_i32 = arith.constant 0 : i32
    %c0_i32_0 = arith.constant 0 : i32
    %c0_i32_1 = arith.constant 0 : i32
    return %c0_i32, %c0_i32_0 : i32, i32
  }
  func.func @transform_4(%arg0: i32) -> (i32, i32) {
    %c0_i32 = arith.constant 0 : i32
    %c0_i32_0 = arith.constant 0 : i32
    return %arg0, %c0_i32 : i32, i32
  }
  func.func @transform_5(%arg0: i32) -> (i32, i32) {
    %c0_i32 = arith.constant 0 : i32
    %c0_i32_0 = arith.constant 0 : i32
    %c0_i32_1 = arith.constant 0 : i32
    return %c0_i32, %c0_i32_0 : i32, i32
  }
  func.func @transform_6(%arg0: i32) -> (i32, i32) {
    %c0_i32 = arith.constant 0 : i32
    %c0_i32_0 = arith.constant 0 : i32
    %c0_i32_1 = arith.constant 0 : i32
    return %c0_i32, %c0_i32_0 : i32, i32
  }
  func.func @transform_7(%arg0: i32) -> (i32, i32) {
    %c0_i32 = arith.constant 0 : i32
    %c0_i32_0 = arith.constant 0 : i32
    return %arg0, %c0_i32 : i32, i32
  }
}

</mosaic_0001>

<llo_original>
// kernel: tpu_custom_call.1
$region0: #{tpu_custom_call.1}
  #allocation0 [shape = 'u32[]', space=smem, size = 0x4, offset = 0x4, fixed_abs, tag = 'smem constant byte address 0x4 - core index']
  #allocation1 [shape = 'u32[72,128]{1,0:T(1,128)}', space=vmem, size = 0x9000, scoped, tag = 'internal scratch']
  %s0 = inlined_call_operand.vmem [shape: f32[16,16], index: 0, kind: input, shape index: {}]
  %s1 = inlined_call_operand.vmem [shape: f32[16,32], index: 1, kind: input, shape index: {}]
  %s2 = inlined_call_operand.vmem [shape: f32[32,4], index: 2, kind: input, shape index: {}]
  %s3 = inlined_call_operand.vmem [shape: f32[16,1], index: 3, kind: input, shape index: {}]
  %s4 = inlined_call_operand.vmem [shape: f32[2,1], index: 4, kind: input, shape index: {}]
  %s5 = inlined_call_operand.vmem [shape: f32[1,4], index: 5, kind: input, shape index: {}]
  %s6 = inlined_call_operand.vmem [shape: f32[1,4], index: 6, kind: input, shape index: {}]
  %s7 = inlined_call_operand.vmem [shape: f32[2,1], index: 7, kind: output, shape index: {}]
  %s8 = sld [smem:[#allocation0]]
  $region38: #{tpu_custom_call.1} parent=0
    _
  %s10 = ssub.s32 1, %s8
  %s11 = scalar_select 0, %s10, %s8
  // Predicated region
  $region2: #{tpu_custom_call.1} parent=0 // pred_check
    _
  $region3: #{tpu_custom_call.1} parent=0 // pred_check_branch
    %13 = sbr.rel (0) target = $region5
  $region4: #{tpu_custom_call.1} parent=0 // pred_region
    _
  $region5: #{tpu_custom_call.1} parent=0 // pred_fallthru
    _
  // Predicated region
  $region6: #{tpu_custom_call.1} parent=0 // pred_check
    _
  $region7: #{tpu_custom_call.1} parent=0 // pred_check_branch
    %15 = sbr.rel (0) target = $region9
  $region8: #{tpu_custom_call.1} parent=0 // pred_region
    _
  $region9: #{tpu_custom_call.1} parent=0 // pred_fallthru
    _
  // Predicated region
  $region10: #{tpu_custom_call.1} parent=0 // pred_check
    _
  $region11: #{tpu_custom_call.1} parent=0 // pred_check_branch
    %17 = sbr.rel (0) target = $region13
  $region12: #{tpu_custom_call.1} parent=0 // pred_region
    _
  $region13: #{tpu_custom_call.1} parent=0 // pred_fallthru
    _
  // Predicated region
  $region14: #{tpu_custom_call.1} parent=0 // pred_check
    _
  $region15: #{tpu_custom_call.1} parent=0 // pred_check_branch
    %19 = sbr.rel (0) target = $region17
  $region16: #{tpu_custom_call.1} parent=0 // pred_region
    _
  $region17: #{tpu_custom_call.1} parent=0 // pred_fallthru
    _
  // Predicated region
  $region18: #{tpu_custom_call.1} parent=0 // pred_check
    _
  $region19: #{tpu_custom_call.1} parent=0 // pred_check_branch
    %21 = sbr.rel (0) target = $region21
  $region20: #{tpu_custom_call.1} parent=0 // pred_region
    _
  $region21: #{tpu_custom_call.1} parent=0 // pred_fallthru
    _
  // Predicated region
  $region22: #{tpu_custom_call.1} parent=0 // pred_check
    _
  $region23: #{tpu_custom_call.1} parent=0 // pred_check_branch
    %23 = sbr.rel (0) target = $region25
  $region24: #{tpu_custom_call.1} parent=0 // pred_region
    _
  $region25: #{tpu_custom_call.1} parent=0 // pred_fallthru
    _
  // Predicated region
  $region26: #{tpu_custom_call.1} parent=0 // pred_check
    _
  $region27: #{tpu_custom_call.1} parent=0 // pred_check_branch
    %25 = sbr.rel (0) target = $region29
  $region28: #{tpu_custom_call.1} parent=0 // pred_region
    _
  $region29: #{tpu_custom_call.1} parent=0 // pred_fallthru
    _
  %v26 = vld [vmem:[%s0] sm:$0xff]
  %v27 = vld [vmem:[%s0 + $0x8] sm:$0xff]
  %v28 = vld [vmem:[%s1] sm:$0xff]
  %v29 = vld [vmem:[%s1 + $0x8] sm:$0xff]
  %vm30 = vcmask 130048
  %v32 = vsel %vm30, %v26, 0
  %v35 = vsel %vm30, %v27, 0
  %37 = vmatpush.msra.mxu0 0.0
  %38 = vmatpush.msra.mxu0 0.0
  %39 = vmatpush.msra.mxu0 0.0
  %40 = vmatpush.msra.mxu0 0.0
  %41 = vmatpush.msra.mxu0 0.0
  %42 = vmatpush.msra.mxu0 0.0
  %43 = vmatpush.msra.mxu0 0.0
  %44 = vmatpush.msra.mxu0 0.0
  %45 = vmatpush.msra.mxu0 0.0
  %46 = vmatpush.msra.mxu0 0.0
  %47 = vmatpush.msra.mxu0 0.0
  %48 = vmatpush.msra.mxu0 0.0
  %49 = vmatpush.msra.mxu0 0.0
  %50 = vmatpush.msra.mxu0 0.0
  %51 = vmatpush.msra.mxu0 %v29
  %52 = vmatpush.msra.mxu0 %v28
  %53 = vmatmul.f32.gmra.mxu0 %v32
  %v54 = vpop.f32.mrf.mxu0
  %v55 = vadd.f32 0.0, %v54
  %56 = vmatmul.f32.gmra.mxu0 %v35
  %v57 = vpop.f32.mrf.mxu0
  %v58 = vadd.f32 0.0, %v57
  %59 = vdwg.mxu0
  %v60 = vld [vmem:[%s2] sm:$0xff]
  %v61 = vld [vmem:[%s2 + $0x8] sm:$0xff]
  %v62 = vld [vmem:[%s2 + $0x10] sm:$0xff]
  %v63 = vld [vmem:[%s2 + $0x18] sm:$0xff]
  %vm64 = vcmask 261120
  %v66 = vsel %vm64, %v55, 0
  %v69 = vsel %vm64, %v58, 0
  %71 = vmatpush.msra.mxu0 0.0
  %72 = vmatpush.msra.mxu0 0.0
  %73 = vmatpush.msra.mxu0 0.0
  %74 = vmatpush.msra.mxu0 0.0
  %75 = vmatpush.msra.mxu0 0.0
  %76 = vmatpush.msra.mxu0 0.0
  %77 = vmatpush.msra.mxu0 0.0
  %78 = vmatpush.msra.mxu0 0.0
  %79 = vmatpush.msra.mxu0 0.0
  %80 = vmatpush.msra.mxu0 0.0
  %81 = vmatpush.msra.mxu0 0.0
  %82 = vmatpush.msra.mxu0 0.0
  %83 = vmatpush.msra.mxu0 %v63
  %84 = vmatpush.msra.mxu0 %v62
  %85 = vmatpush.msra.mxu0 %v61
  %86 = vmatpush.msra.mxu0 %v60
  %87 = vmatmul.f32.gmra.mxu0 %v66
  %v88 = vpop.f32.mrf.mxu0
  %v89 = vadd.f32 0.0, %v88
  %90 = vmatmul.f32.gmra.mxu0 %v69
  %v91 = vpop.f32.mrf.mxu0
  %v92 = vadd.f32 0.0, %v91
  %93 = vdwg.mxu0
  %v94 = vmul.f32 %v55, %v55
  %v95 = vmul.f32 %v58, %v58
  %v96 = vsel %vm64, %v94, 0.0
  %97 = vadd.xlane.f32.xlu0 %v96
  %v98 = vpop.xlane.xlu0 %97
  %v99 = vsel %vm64, %v95, 0.0
  %100 = vadd.xlane.f32.xlu0 %v99
  %v101 = vpop.xlane.xlu0 %100
  %v102 = vmax.f32 %v98, 1e-16
  %v103 = vmax.f32 %v101, 1e-16
  %v104 = vrsqrt.pop %v102
  %v105 = vmul.f32 %v104, %v102
  %v106 = vmul.f32 %v105, %v104
  %v107 = vmul.f32 0.5, %v106
  %v108 = vsub.f32 1.5, %v107
  %v109 = vmul.f32 %v104, %v108
  %vm110 = vweird.f32 %v102
  %vm111 = vweird.f32 %v104
  %vm112 = vmor %vm110, %vm111
  %v113 = vsel %vm112, %v104, %v109
  %v114 = vrsqrt.pop %v103
  %v115 = vmul.f32 %v114, %v103
  %v116 = vmul.f32 %v115, %v114
  %v117 = vmul.f32 0.5, %v116
  %v118 = vsub.f32 1.5, %v117
  %v119 = vmul.f32 %v114, %v118
  %vm120 = vweird.f32 %v103
  %vm121 = vweird.f32 %v114
  %vm122 = vmor %vm120, %vm121
  %v123 = vsel %vm122, %v114, %v119
  %v124 = vld [vmem:[%s3] sm:$0xff]
  %v125 = vld [vmem:[%s3 + $0x8] sm:$0xff]
  %v126 = vmul.f32 %v113, %v124
  %v127 = vmul.f32 %v123, %v125
  %129 = vset.pattern.permute.xlu0 0
  %130 = vperm.xlu0 %129, %v126
  %v131 = vpop.permute.xlu0 %130
  %134 = vset.pattern.permute.xlu0 0
  %135 = vperm.xlu0 %134, %v127
  %v136 = vpop.permute.xlu0 %135
  %v138 = vmul.f32 %v89, %v131
  %v139 = vmul.f32 %v92, %v136
  %vm140 = vcmask 31744
  %v141 = vsel %vm140, %v138, 0.0
  %v142 = vrot.slane %v141, 4
  %v143 = vadd.f32 %v141, %v142
  %v144 = vrot.slane %v143, 2
  %v145 = vadd.f32 %v143, %v144
  %v146 = vrot.slane %v145, 1
  %v147 = vadd.f32 %v145, %v146
  %v148 = vsel %vm140, %v139, 0.0
  %v149 = vrot.slane %v148, 4
  %v150 = vadd.f32 %v148, %v149
  %v151 = vrot.slane %v150, 2
  %v152 = vadd.f32 %v150, %v151
  %v153 = vrot.slane %v152, 1
  %v154 = vadd.f32 %v152, %v153
  %vm157 = vcmask 1041409
  %v158 = vsel %vm157, %v154, %v147
  %vm160 = vcmask 25600
  %v161 = vsel %vm160, %v158, -inf
  %162 = vmax.xlane.f32.xlu0 %v161
  %v163 = vpop.xlane.xlu0 %162
  %v165 = vrot.slane %v163, 1
  %v168 = vsub.f32 %v147, %v163
  %v169 = vsub.f32 %v154, %v165
  %v170 = vmul.f32 %v168, 1.442695
  %v171 = vpow.pop %v170
  %v172 = vmul.f32 %v169, 1.442695
  %v173 = vpow.pop %v172
  %v176 = vrot.slane %v173, 7
  %v177 = vsel %vm157, %v176, %v171
  %v179 = vsel %vm160, %v177, 0.0
  %180 = vadd.xlane.f32.xlu0 %v179
  %v181 = vpop.xlane.xlu0 %180
  %v183 = vrot.slane %v181, 1
  %v186 = vrcp.pop %v181
  %v187 = vmul.f32 %v181, %v186
  %v188 = vsub.f32 1.0, %v187
  %v189 = vmul.f32 %v186, %v188
  %v190 = vadd.f32 %v186, %v189
  %vm191 = vweird.f32 %v181
  %vm192 = vweird.f32 %v186
  %vm193 = vmor %vm191, %vm192
  %v194 = vsel %vm193, %v186, %v190
  %v195 = vand.u32 2147483647, %v181
  %vm196 = vcmp.eq.f32.partialorder %v195, 8.507059e+37
  %v197 = vand.u32 %v181, 2147483648
  %v198 = vor.u32 1.1754944e-38, %v197
  %v199 = vsel %vm196, %v198, %v194
  %v200 = vmul.f32 %v171, %v199
  %v201 = vrcp.pop %v183
  %v202 = vmul.f32 %v183, %v201
  %v203 = vsub.f32 1.0, %v202
  %v204 = vmul.f32 %v201, %v203
  %v205 = vadd.f32 %v201, %v204
  %vm206 = vweird.f32 %v183
  %vm207 = vweird.f32 %v201
  %vm208 = vmor %vm206, %vm207
  %v209 = vsel %vm208, %v201, %v205
  %v210 = vand.u32 2147483647, %v183
  %vm211 = vcmp.eq.f32.partialorder %v210, 8.507059e+37
  %v212 = vand.u32 %v183, 2147483648
  %v213 = vor.u32 1.1754944e-38, %v212
  %v214 = vsel %vm211, %v213, %v209
  %v215 = vmul.f32 %v173, %v214
  %v216 = vld [vmem:[%s4] sm:$0x3]
  %v217 = vld [vmem:[%s5] sm:$0x1]
  %v219 = vperm.slane %v217, 0
  %222 = vset.pattern.permute.xlu0 0
  %223 = vperm.xlu0 %222, %v216
  %v224 = vpop.permute.xlu0 %223
  %v226 = vmul.f32 %v219, %v224
  %v227 = vld [vmem:[%s6] sm:$0x1]
  %v229 = vperm.slane %v227, 0
  %v231 = vadd.f32 %v226, %v229
  %v233 = vrot.slane %v231, 1
  %v236 = vmul.f32 %v200, %v231
  %v237 = vmul.f32 %v215, %v233
  %v240 = vrot.slane %v237, 7
  %v241 = vsel %vm157, %v240, %v236
  %v243 = vsel %vm160, %v241, 0.0
  %244 = vadd.xlane.f32.xlu0 %v243
  %v245 = vpop.xlane.xlu0 %244
  %vm246 = vcmask 1024
  %247 = vst.msk [vmem:[%s7] sm:$0x3] %vm246, %v245
  // Predicated region
  $region30: #{tpu_custom_call.1} parent=0 // pred_check
    _
  $region31: #{tpu_custom_call.1} parent=0 // pred_check_branch
    %249 = sbr.rel (0) target = $region33
  $region32: #{tpu_custom_call.1} parent=0 // pred_region
    _
  $region33: #{tpu_custom_call.1} parent=0 // pred_fallthru
    _
  // Predicated region
  $region34: #{tpu_custom_call.1} parent=0 // pred_check
    _
  $region35: #{tpu_custom_call.1} parent=0 // pred_check_branch
    %251 = sbr.rel (0) target = $region37
  $region36: #{tpu_custom_call.1} parent=0 // pred_region
    _
  $region37: #{tpu_custom_call.1} parent=0 // pred_fallthru
    _

</llo_original>
